<compile_context>
chip_gen: v6e
topology: v6e:2x2x1
jax: 0.10.0
libtpu: 0.0.40
codegen_flags: <defaults>
</compile_context>

<pallas_src>
import jax
import jax.numpy as jnp
from jax.experimental import pallas as pl
from jax.experimental.pallas import tpu as pltpu


def _round_up(x, m):
    return -(-x // m) * m


def _sublanes(dtype):
    itemsize = jnp.dtype(dtype).itemsize
    return 8 * max(1, 4 // itemsize)  # f32 -> 8, bf16 -> 16, int8 -> 32


def _padded_block_bytes(shape, dtype):
    """VMEM bytes of one block, including (sublane, 128-lane) layout padding."""
    itemsize = jnp.dtype(dtype).itemsize
    lead = 1
    for s in shape[:-2]:
        lead *= int(s)
    return (lead
            * _round_up(int(shape[-2]), _sublanes(dtype))
            * _round_up(int(shape[-1]), 128)
            * itemsize)


def _mean_pool_kernel(x_ref, m_ref, c_ref, z_ref, acc_ref):
    # x_ref:   (TB, TN, D)  instance features, input dtype
    # m_ref:   (TB, 1, TN)  mask (0./1.), input dtype
    # c_ref:   (TB, 1, 1)   f32 effective instance counts
    # z_ref:   (TB, 1, D)   output, resident across the bag grid axis
    # acc_ref: (TB, 1, D)   f32 accumulator scratch
    n = pl.program_id(1)

    @pl.when(n == 0)
    def _init():
        acc_ref[...] = jnp.zeros_like(acc_ref)

    # Fused mask-multiply + bag reduction: 'b1n,bnd->b1d' on the MXU with f32
    # accumulation (no full-size f32 temporaries, no mask relayout).
    prec = (jax.lax.Precision.HIGHEST
            if x_ref.dtype == jnp.float32 else jax.lax.Precision.DEFAULT)
    acc_ref[...] += jax.lax.dot_general(
        m_ref[...], x_ref[...],
        dimension_numbers=(((2,), (1,)), ((0,), (0,))),
        preferred_element_type=jnp.float32,
        precision=prec,
    )

    @pl.when(n == pl.num_programs(1) - 1)
    def _finalize():
        inv = pl.reciprocal(jnp.maximum(c_ref[...], 1.0), approx=False)
        z_ref[...] = (acc_ref[...] * inv).astype(z_ref.dtype)


def _choose_tiles(B, N, D, dtype):
    """Pick (tb, tn) with layout-padding-aware, per-generation VMEM budgets."""
    itemsize = jnp.dtype(dtype).itemsize
    subl = _sublanes(dtype)
    d_pad = _round_up(D, 128)

    try:
        info = pltpu.get_tpu_info()
        vmem_cap = int(getattr(info, "vmem_capacity_bytes", 64 << 20))
    except Exception:  # query unavailable -> be conservative (v7x: 64 MiB)
        vmem_cap = 64 << 20

    # X-block budget: ~12 MiB on the 128 MiB parts (v5e/v6e), ~4 MiB on v7x.
    x_budget = (12 << 20) if vmem_cap >= (96 << 20) else (4 << 20)

    full_row = _round_up(N, subl) * d_pad * itemsize  # one batch row, full bag
    if full_row <= x_budget:
        tn = N                                        # whole bag per grid step
        tb = max(1, x_budget // full_row)
    else:
        # Tile the bag axis; tn must be a multiple of 128 (mask lanes).
        tn = max(128, (x_budget // (d_pad * itemsize)) // 128 * 128)
        tn = min(tn, _round_up(N, 128))
        tb = max(1, x_budget // (_round_up(tn, subl) * d_pad * itemsize))

    # Keep >= 2 (ideally >= 4) batch grid steps: v7x megacore + DMA pipelining.
    if B >= 8:
        tb = min(tb, -(-B // 4))
    elif B >= 2:
        tb = min(tb, -(-B // 2))
    tb = max(1, min(tb, B, 256))  # cap batch tile (keeps compile/unroll sane)

    return tb, tn, vmem_cap


def mean_pool(X, mask=None):
    """Pallas implementation of torchmil MeanPool.forward."""
    B, N, D = X.shape
    if mask is None:
        mask = jnp.ones((B, N), dtype=bool)

    # Exact per-bag counts (int32) - also needed for the any-empty rule.
    counts = jnp.sum(mask.astype(jnp.int32), axis=1)  # (B,)

    tb, tn, vmem_cap = _choose_tiles(B, N, D, X.dtype)
    b_pad = _round_up(B, tb)
    n_pad = _round_up(N, tn)

    m3 = mask.astype(X.dtype).reshape(B, 1, N)             # MXU lhs (b,1,n)
    c3 = counts.astype(jnp.float32).reshape(B, 1, 1)

    if b_pad != B or n_pad != N:
        X_in = jnp.pad(X, ((0, b_pad - B), (0, n_pad - N), (0, 0)))
        m_in = jnp.pad(m3, ((0, b_pad - B), (0, 0), (0, n_pad - N)))
        c_in = jnp.pad(c3, ((0, b_pad - B), (0, 0), (0, 0)))
    else:
        X_in, m_in, c_in = X, m3, c3

    # Layout-padding-aware VMEM accounting (inputs/output double-buffered).
    x_blk = _padded_block_bytes((tb, tn, D), X.dtype)
    m_blk = _padded_block_bytes((tb, 1, tn), X.dtype)
    c_blk = _padded_block_bytes((tb, 1, 1), jnp.float32)
    z_blk = _padded_block_bytes((tb, 1, D), X.dtype)
    acc_blk = _padded_block_bytes((tb, 1, D), jnp.float32)
    need = 2 * (x_blk + m_blk + c_blk + z_blk) + acc_blk
    vmem_limit = int(min(max(need + (4 << 20), 16 << 20),
                         max(need + (2 << 20), (vmem_cap * 3) // 4)))

    grid = (b_pad // tb, n_pad // tn)

    z = pl.pallas_call(
        _mean_pool_kernel,
        out_shape=jax.ShapeDtypeStruct((b_pad, 1, D), X.dtype),
        grid_spec=pltpu.PrefetchScalarGridSpec(
            num_scalar_prefetch=0,
            grid=grid,
            in_specs=[
                pl.BlockSpec((tb, tn, D), lambda b, n: (b, n, 0)),
                pl.BlockSpec((tb, 1, tn), lambda b, n: (b, 0, n)),
                pl.BlockSpec((tb, 1, 1), lambda b, n: (b, 0, 0)),
            ],
            out_specs=pl.BlockSpec((tb, 1, D), lambda b, n: (b, 0, 0)),
            scratch_shapes=[pltpu.VMEM((tb, 1, D), jnp.float32)],
        ),
        compiler_params=pltpu.CompilerParams(
            dimension_semantics=("parallel", "arbitrary"),
            vmem_limit_bytes=vmem_limit,
        ),
    )(X_in, m_in, c_in)

    z = z.reshape(b_pad, D)[:B]
    # PyTorch semantics: if ANY bag has zero effective instances, the whole
    # output is zeros.
    any_empty = jnp.any(counts == 0)
    return jnp.where(any_empty, jnp.zeros((B, D), X.dtype), z)


def _reference(X, mask=None):
    B, N, D = X.shape
    if mask is None:
        mask = jnp.ones((B, N), dtype=bool)
    m = mask.astype(jnp.float32)[..., None]
    eff = jnp.sum(m, axis=1)
    z = (jnp.sum(X.astype(jnp.float32) * m, axis=1)
         / jnp.maximum(eff, 1.0)).astype(X.dtype)
    return jnp.where(jnp.any(eff == 0), jnp.zeros((B, D), X.dtype), z)


if __name__ == "__main__":
    key = jax.random.PRNGKey(0)
    B, N, D = 2, 8, 32
    kx, km = jax.random.split(key)
    X = jax.random.normal(kx, (B, N, D), dtype=jnp.float32)

    # Case 1: no mask (all instances active).
    z1 = jax.block_until_ready(mean_pool(X))
    r1 = _reference(X)

    # Case 2: partial mask.
    mask = jax.random.bernoulli(km, p=0.7, shape=(B, N))
    mask = mask.at[:, 0].set(True)  # ensure no bag is fully empty
    z2 = jax.block_until_ready(mean_pool(X, mask))
    r2 = _reference(X, mask)

    # Case 3: one bag fully empty -> entire output must be zeros.
    mask_empty = mask.at[0, :].set(False)
    z3 = jax.block_until_ready(mean_pool(X, mask_empty))
    r3 = _reference(X, mask_empty)

    assert jnp.allclose(z1, r1, atol=1e-5), "case 1 mismatch"
    assert jnp.allclose(z2, r2, atol=1e-5), "case 2 mismatch"
    assert jnp.allclose(z3, r3, atol=1e-5) and bool(jnp.all(z3 == 0)), "case 3 mismatch"

    print("KERNEL_OK")
</pallas_src>

<mosaic_0001>
module attributes {stable_mosaic.version = 11 : i64} {
  func.func @_mean_pool_kernel(%arg0: i32, %arg1: i32, %arg2: memref<1x8x32xf32, #tpu.memory_space<vmem>>, %arg3: memref<1x1x8xf32, #tpu.memory_space<vmem>>, %arg4: memref<1x1x1xf32, #tpu.memory_space<vmem>>, %arg5: memref<1x1x32xf32, #tpu.memory_space<vmem>>, %arg6: memref<1x1x32xf32, #tpu.memory_space<vmem>>) attributes {dimension_semantics = [#tpu.dimension_semantics<parallel>, #tpu.dimension_semantics<arbitrary>], iteration_bounds = array<i64: 2, 1>, scalar_prefetch = 0 : i64, scratch_operands = 1 : i64, tpu.core_type = #tpu.core_type<tc>, window_params = [{transform_indices = @transform_0, window_bounds = array<i64: 1, 8, 32>}, {transform_indices = @transform_1, window_bounds = array<i64: 1, 1, 8>}, {transform_indices = @transform_2, window_bounds = array<i64: 1, 1, 1>}, {transform_indices = @transform_3, window_bounds = array<i64: 1, 1, 32>}]} {
    %c0_i32 = arith.constant 0 : i32
    %0 = arith.cmpi eq, %arg1, %c0_i32 : i32
    %1 = arith.extui %0 : i1 to i32
    %c0_i32_0 = arith.constant 0 : i32
    %2 = arith.cmpi ne, %1, %c0_i32_0 : i32
    scf.if %2 {
      %cst_14 = arith.constant 0.000000e+00 : f32
      %12 = vector.broadcast %cst_14 : f32 to vector<1x1x32xf32>
      %c0_15 = arith.constant 0 : index
      %c0_16 = arith.constant 0 : index
      %c0_17 = arith.constant 0 : index
      %13 = vector.load %arg6[%c0_15, %c0_16, %c0_17] : memref<1x1x32xf32, #tpu.memory_space<vmem>>, vector<1x1x32xf32>
      tpu.vector_store %arg6[%c0_15, %c0_16, %c0_17], %12 {strides = array<i32>} : memref<1x1x32xf32, #tpu.memory_space<vmem>>, vector<1x1x32xf32>,
    } else {
    }
    %c0 = arith.constant 0 : index
    %c0_1 = arith.constant 0 : index
    %c0_2 = arith.constant 0 : index
    %3 = vector.load %arg6[%c0, %c0_1, %c0_2] : memref<1x1x32xf32, #tpu.memory_space<vmem>>, vector<1x1x32xf32>
    %c0_3 = arith.constant 0 : index
    %c0_4 = arith.constant 0 : index
    %c0_5 = arith.constant 0 : index
    %4 = vector.load %arg3[%c0_3, %c0_4, %c0_5] : memref<1x1x8xf32, #tpu.memory_space<vmem>>, vector<1x1x8xf32>
    %c0_6 = arith.constant 0 : index
    %c0_7 = arith.constant 0 : index
    %c0_8 = arith.constant 0 : index
    %5 = vector.load %arg2[%c0_6, %c0_7, %c0_8] : memref<1x8x32xf32, #tpu.memory_space<vmem>>, vector<1x8x32xf32>
    %cst = arith.constant dense<0.000000e+00> : vector<1x1x32xf32>
    %6 = tpu.matmul %4, %5, %cst {dimension_numbers = #tpu.dot_dimension_numbers<[2], [1], [1], [2], [0, 0, 0, 1, 1, 2], [0], [0]>, precision = #tpu.contract_precision<fp32>} : vector<1x1x8xf32>, vector<1x8x32xf32>, vector<1x1x32xf32> -> vector<1x1x32xf32>
    %7 = arith.addf %3, %6 : vector<1x1x32xf32>
    %c0_9 = arith.constant 0 : index
    %c0_10 = arith.constant 0 : index
    %c0_11 = arith.constant 0 : index
    %8 = vector.load %arg6[%c0_9, %c0_10, %c0_11] : memref<1x1x32xf32, #tpu.memory_space<vmem>>, vector<1x1x32xf32>
    tpu.vector_store %arg6[%c0_9, %c0_10, %c0_11], %7 {strides = array<i32>} : memref<1x1x32xf32, #tpu.memory_space<vmem>>, vector<1x1x32xf32>,
    %c0_i32_12 = arith.constant 0 : i32
    %9 = arith.cmpi eq, %arg1, %c0_i32_12 : i32
    %10 = arith.extui %9 : i1 to i32
    %c0_i32_13 = arith.constant 0 : i32
    %11 = arith.cmpi ne, %10, %c0_i32_13 : i32
    scf.if %11 {
      %c0_14 = arith.constant 0 : index
      %c0_15 = arith.constant 0 : index
      %c0_16 = arith.constant 0 : index
      %12 = vector.load %arg4[%c0_14, %c0_15, %c0_16] : memref<1x1x1xf32, #tpu.memory_space<vmem>>, vector<1x1x1xf32>
      %cst_17 = arith.constant 1.000000e+00 : f32
      %13 = vector.broadcast %cst_17 : f32 to vector<1x1x1xf32>
      %14 = arith.maximumf %12, %13 : vector<1x1x1xf32>
      %15 = tpu.reciprocal %14 : vector<1x1x1xf32> -> vector<1x1x1xf32>
      %c0_18 = arith.constant 0 : index
      %c0_19 = arith.constant 0 : index
      %c0_20 = arith.constant 0 : index
      %16 = vector.load %arg6[%c0_18, %c0_19, %c0_20] : memref<1x1x32xf32, #tpu.memory_space<vmem>>, vector<1x1x32xf32>
      %17 = vector.broadcast %15 : vector<1x1x1xf32> to vector<1x1x32xf32>
      %18 = arith.mulf %16, %17 : vector<1x1x32xf32>
      %c0_21 = arith.constant 0 : index
      %c0_22 = arith.constant 0 : index
      %c0_23 = arith.constant 0 : index
      %19 = vector.load %arg5[%c0_21, %c0_22, %c0_23] : memref<1x1x32xf32, #tpu.memory_space<vmem>>, vector<1x1x32xf32>
      tpu.vector_store %arg5[%c0_21, %c0_22, %c0_23], %18 {strides = array<i32>} : memref<1x1x32xf32, #tpu.memory_space<vmem>>, vector<1x1x32xf32>,
    } else {
    }
    return
  }
  func.func @transform_0(%arg0: i32, %arg1: i32) -> (i32, i32, i32) {
    %c0_i32 = arith.constant 0 : i32
    %c0_i32_0 = arith.constant 0 : i32
    return %arg0, %arg1, %c0_i32 : i32, i32, i32
  }
  func.func @transform_1(%arg0: i32, %arg1: i32) -> (i32, i32, i32) {
    %c0_i32 = arith.constant 0 : i32
    %c0_i32_0 = arith.constant 0 : i32
    return %arg0, %c0_i32, %arg1 : i32, i32, i32
  }
  func.func @transform_2(%arg0: i32, %arg1: i32) -> (i32, i32, i32) {
    %c0_i32 = arith.constant 0 : i32
    %c0_i32_0 = arith.constant 0 : i32
    %c0_i32_1 = arith.constant 0 : i32
    return %arg0, %c0_i32, %c0_i32_0 : i32, i32, i32
  }
  func.func @transform_3(%arg0: i32, %arg1: i32) -> (i32, i32, i32) {
    %c0_i32 = arith.constant 0 : i32
    %c0_i32_0 = arith.constant 0 : i32
    %c0_i32_1 = arith.constant 0 : i32
    return %arg0, %c0_i32, %c0_i32_0 : i32, i32, i32
  }
}

</mosaic_0001>

<llo_original>
// kernel: tpu_custom_call.1
$region0: #{tpu_custom_call.1}
  #allocation0 [shape = 'u32[]', space=smem, size = 0x4, offset = 0x4, fixed_abs, tag = 'smem constant byte address 0x4 - core index']
  #allocation1 [shape = 'u32[144,128]{1,0:T(1,128)}', space=vmem, size = 0x12000, scoped, tag = 'internal scratch']
  #allocation2 [shape = 'f32[1,1,32]{2,1,0:T(1,128)}', space=vmem, size = 0x200, scoped, tag = 'scratch operand']
  %s0 = inlined_call_operand.hbm [shape: f32[2,8,32], index: 0, kind: input, shape index: {}]
  %s1 = inlined_call_operand.vmem [shape: f32[2,1,8], index: 1, kind: input, shape index: {}]
  %s2 = inlined_call_operand.vmem [shape: f32[2,1,1], index: 2, kind: input, shape index: {}]
  %s3 = inlined_call_operand.hbm [shape: f32[2,1,32], index: 3, kind: output, shape index: {}]
  %s4 = sld [smem:[#allocation0]]
  $region57: #{tpu_custom_call.1} parent=0
    _
  %s6 = ssub.s32 1, %s4
  %s7 = scalar_select 0, %s6, %s4
  $region1: #{tpu_custom_call.1} parent=0
    #allocation3 [shape = 'u8[8192]{0}', space=vmem, size = 0x2000, scoped, tag = 'input window, operand 0']
    #allocation4 [shape = 's32[2]{0}', space=sflag, size = 0x8, scoped, tag = 'scoped memory for tpu_custom_call.1']
    #allocation5 [shape = 's32[2]{0}', space=sflag, size = 0x8, scoped, tag = 'scoped memory for tpu_custom_call.1']
    #allocation6 [shape = 'u8[1024]{0}', space=vmem, size = 0x400, scoped, tag = 'output window, operand 0']
    %8 = vsyncpa [#allocation4], 0
    %s9 = scalar_lea.sflag [#allocation4], 1
    %10 = vsyncpa %s9, 0
    %11 = vsyncpa [#allocation5], 0
    %s12 = scalar_lea.sflag [#allocation5], 1
    %13 = vsyncpa %s12, 0
    loop: start=0, step=1, limit=4
    $region2: #{tpu_custom_call.1} parent=1 // loop_pre_header
      _
    $region3: #{tpu_custom_call.1} parent=1 // loop_header
      %s15 = sphi 0, %s19
      %p16 = scmp.ge.s32.totalorder %s15, 4
      %s22 = sphi 0, %s34
      %s23 = sphi 0, %s30
      %s24 = sphi 0, %s22
      %s25 = sphi 0, %s23
      %s26 = sphi 0, %s24
      %s27 = sphi 0, %s25
      %s39 = sphi 0, %s41
      %s42 = sphi 0, %s39
      %s43 = sphi 0, %s42
      %s59 = sphi 0, %s43
      %s67 = sphi 0, %s69
      %s70 = sphi 0, %s67
      %s71 = sphi 0, %s70
      %s87 = sphi 0, %s71
      %s93 = sphi 0, %s95
      %s96 = sphi 0, %s93
      %s97 = sphi 0, %s96
      %s113 = sphi 0, %s97
      %s119 = sphi 0, %s121
      %s122 = sphi 0, %s119
      %s123 = sphi 0, %s122
      %s139 = sphi 0, %s123
    $region4: #{tpu_custom_call.1} parent=1 // loop_header_branch
      %18 = sbr.rel (%p16) target = $region8
    $region5: #{tpu_custom_call.1} parent=1 // loop_body
      %s20 = ssub.s32 %s15, 1
      %s21 = ssub.s32 %s15, 2
      %s28 = sadd.s32 1, %s23
      %p29 = scmp.ge.s32.totalorder %s28, 1
      %s30 = scalar_select %p29, 0, %s28
      %s31 = sadd.s32 1, %s22
      %s32 = scalar_select %p29, %s31, %s22
      %p33 = scmp.ge.s32.totalorder %s32, 2
      %s34 = scalar_select %p33, 0, %s32
      %s35 = ssub.s32 %s22, %s34
      %s36 = ssub.s32 %s23, %s30
      %s37 = sor.u32 %s35, %s36
      %p38 = scmp.eq.s32.totalorder %s37, 0
      %s40 = sadd.s32 %s39, 1
      %s41 = scalar_select %p38, %s39, %s40
      %p44 = pneg %p38
      %p45 = scmp.eq.s32.totalorder %s15, 1
      %p46 = por %p44, %p45
      %p47 = scmp.ne.s32.totalorder %s39, %s42
      %p48 = scmp.eq.s32.totalorder %s15, 0
      %p49 = por %p47, %p48
      %p50 = scmp.ne.s32.totalorder %s39, %s42
      %p51 = scmp.eq.s32.totalorder %s20, 1
      %p52 = por %p50, %p51
      %p53 = scmp.ne.s32.totalorder %s42, %s43
      %p54 = scmp.eq.s32.totalorder %s20, 0
      %p55 = por %p53, %p54
      %p56 = scmp.ne.s32.totalorder %s42, %s43
      %p57 = scmp.eq.s32.totalorder %s21, 1
      %p58 = por %p56, %p57
      %p60 = scmp.ne.s32.totalorder %s43, %s59
      %p61 = scmp.eq.s32.totalorder %s21, 0
      %p62 = por %p60, %p61
      %s63 = ssub.s32 %s22, %s34
      %s64 = ssub.s32 %s23, %s30
      %s65 = sor.u32 %s63, %s64
      %p66 = scmp.eq.s32.totalorder %s65, 0
      %s68 = sadd.s32 %s67, 1
      %s69 = scalar_select %p66, %s67, %s68
      %p72 = pneg %p66
      %p73 = scmp.eq.s32.totalorder %s15, 1
      %p74 = por %p72, %p73
      %p75 = scmp.ne.s32.totalorder %s67, %s70
      %p76 = scmp.eq.s32.totalorder %s15, 0
      %p77 = por %p75, %p76
      %p78 = scmp.ne.s32.totalorder %s67, %s70
      %p79 = scmp.eq.s32.totalorder %s20, 1
      %p80 = por %p78, %p79
      %p81 = scmp.ne.s32.totalorder %s70, %s71
      %p82 = scmp.eq.s32.totalorder %s20, 0
      %p83 = por %p81, %p82
      %p84 = scmp.ne.s32.totalorder %s70, %s71
      %p85 = scmp.eq.s32.totalorder %s21, 1
      %p86 = por %p84, %p85
      %p88 = scmp.ne.s32.totalorder %s71, %s87
      %p89 = scmp.eq.s32.totalorder %s21, 0
      %p90 = por %p88, %p89
      %s91 = ssub.s32 %s22, %s34
      %p92 = scmp.eq.s32.totalorder %s91, 0
      %s94 = sadd.s32 %s93, 1
      %s95 = scalar_select %p92, %s93, %s94
      %p98 = pneg %p92
      %p99 = scmp.eq.s32.totalorder %s15, 1
      %p100 = por %p98, %p99
      %p101 = scmp.ne.s32.totalorder %s93, %s96
      %p102 = scmp.eq.s32.totalorder %s15, 0
      %p103 = por %p101, %p102
      %p104 = scmp.ne.s32.totalorder %s93, %s96
      %p105 = scmp.eq.s32.totalorder %s20, 1
      %p106 = por %p104, %p105
      %p107 = scmp.ne.s32.totalorder %s96, %s97
      %p108 = scmp.eq.s32.totalorder %s20, 0
      %p109 = por %p107, %p108
      %p110 = scmp.ne.s32.totalorder %s96, %s97
      %p111 = scmp.eq.s32.totalorder %s21, 1
      %p112 = por %p110, %p111
      %p114 = scmp.ne.s32.totalorder %s97, %s113
      %p115 = scmp.eq.s32.totalorder %s21, 0
      %p116 = por %p114, %p115
      %s117 = ssub.s32 %s22, %s34
      %p118 = scmp.eq.s32.totalorder %s117, 0
      %s120 = sadd.s32 %s119, 1
      %s121 = scalar_select %p118, %s119, %s120
      %p124 = pneg %p118
      %p125 = scmp.eq.s32.totalorder %s15, 1
      %p126 = por %p124, %p125
      %p127 = scmp.ne.s32.totalorder %s119, %s122
      %p128 = scmp.eq.s32.totalorder %s15, 0
      %p129 = por %p127, %p128
      %p130 = scmp.ne.s32.totalorder %s119, %s122
      %p131 = scmp.eq.s32.totalorder %s20, 1
      %p132 = por %p130, %p131
      %p133 = scmp.ne.s32.totalorder %s122, %s123
      %p134 = scmp.eq.s32.totalorder %s20, 0
      %p135 = por %p133, %p134
      %p136 = scmp.ne.s32.totalorder %s122, %s123
      %p137 = scmp.eq.s32.totalorder %s21, 1
      %p138 = por %p136, %p137
      %p140 = scmp.ne.s32.totalorder %s123, %s139
      %p141 = scmp.eq.s32.totalorder %s21, 0
      %p142 = por %p140, %p141
      %p143 = scmp.le.s32.totalorder 1, %s15
      %p144 = scmp.lt.s32.totalorder %s15, 3
      %p145 = pnand %p143, %p144
      %p146 = pneg %p145
      // Predicated region
      $region9: #{tpu_custom_call.1} parent=5 // pred_check
        _
      $region10: #{tpu_custom_call.1} parent=5 // pred_check_branch
        %148 = sbr.rel (%p145) target = $region12
      $region11: #{tpu_custom_call.1} parent=5 // pred_region
        %s149 = ssub.s32 %s15, 1
      $region12: #{tpu_custom_call.1} parent=5 // pred_fallthru
        _
      %p150 = scmp.lt.s32.totalorder %s15, 2
      // Predicated region
      $region13: #{tpu_custom_call.1} parent=5 // pred_check
        %p151 = pneg %p150
      $region14: #{tpu_custom_call.1} parent=5 // pred_check_branch
        %153 = sbr.rel (%p151) target = $region16
      $region15: #{tpu_custom_call.1} parent=5 // pred_region
        // Predicated region
        $region17: #{tpu_custom_call.1} parent=15 // pred_check
          %p154 = pneg %p49
        $region18: #{tpu_custom_call.1} parent=15 // pred_check_branch
          %156 = sbr.rel (%p154) target = $region20
        $region19: #{tpu_custom_call.1} parent=15 // pred_region
          %s157 = sand.u32 %s39, 1
          %s158 = scalar_lea.sflag [#allocation4], %s157
          %s159 = sand.u32 %s39, 1
          %s160 = smul.addr %s159, 8
          %s161 = scalar_lea.vmem [#allocation3], %s160
          %s163 = ssub.s32 128, 128
          %164 = vsyncadd %s158, %s163
          %s165 = sadd.s32 %s23, %s22
          %s166 = smul.addr %s165, 128
          %s167 = scalar_lea.hbm %s0, %s166
          %s169 = sshll.u32 %s161, 4
          %s170 = int_to_ptr.vmem [resolvable:$true] %s169
          %172 = dma.hbm_to_vmem [thread:$0]  %s167, 128, %s170, %s158
        $region20: #{tpu_custom_call.1} parent=15 // pred_fallthru
          _
        // Predicated region
        $region21: #{tpu_custom_call.1} parent=15 // pred_check
          %p173 = pneg %p77
        $region22: #{tpu_custom_call.1} parent=15 // pred_check_branch
          %175 = sbr.rel (%p173) target = $region24
        $region23: #{tpu_custom_call.1} parent=15 // pred_region
          %p176 = scmp.lt.s32.totalorder %s22, 1
          %s177 = scalar_select %p176, %s22, 1
          %p178 = scmp.lt.s32.totalorder %s23, 0
          %s179 = scalar_select %p178, %s23, 0
          %s180 = sadd.s32 %s179, %s177
          %s181 = scalar_lea.vmem %s1, %s180
        $region24: #{tpu_custom_call.1} parent=15 // pred_fallthru
          _
        // Predicated region
        $region25: #{tpu_custom_call.1} parent=15 // pred_check
          %p182 = pneg %p103
        $region26: #{tpu_custom_call.1} parent=15 // pred_check_branch
          %184 = sbr.rel (%p182) target = $region28
        $region27: #{tpu_custom_call.1} parent=15 // pred_region
          %p185 = scmp.lt.s32.totalorder %s22, 1
          %s186 = scalar_select %p185, %s22, 1
          %s187 = scalar_lea.vmem %s2, %s186
        $region28: #{tpu_custom_call.1} parent=15 // pred_fallthru
          _
      $region16: #{tpu_custom_call.1} parent=5 // pred_fallthru
        _
      %p188 = scmp.le.s32.totalorder 1, %s15
      %p189 = scmp.lt.s32.totalorder %s15, 3
      %p190 = pnand %p188, %p189
      %p191 = pneg %p190
      // Predicated region
      $region29: #{tpu_custom_call.1} parent=5 // pred_check
        _
      $region30: #{tpu_custom_call.1} parent=5 // pred_check_branch
        %193 = sbr.rel (%p190) target = $region32
      $region31: #{tpu_custom_call.1} parent=5 // pred_region
        %s194 = ssub.s32 %s15, 1
        %s195 = sand.u32 %s42, 1
        %s196 = scalar_lea.sflag [#allocation4], %s195
        %s197 = sand.u32 %s42, 1
        %s198 = smul.addr %s197, 8
        %s199 = scalar_lea.vmem [#allocation3], %s198
        // Predicated region
        $region33: #{tpu_custom_call.1} parent=31 // pred_check
          %p200 = pneg %p55
        $region34: #{tpu_custom_call.1} parent=31 // pred_check_branch
          %202 = sbr.rel (%p200) target = $region36
        $region35: #{tpu_custom_call.1} parent=31 // pred_region
          %203 = dma.done %s196, 128
        $region36: #{tpu_custom_call.1} parent=31 // pred_fallthru
          _
        %s204 = sand.u32 %s42, 1
        %s205 = scalar_lea.sflag [#allocation4], %s204
        %s206 = sand.u32 %s42, 1
        %s207 = smul.addr %s206, 8
        %s208 = scalar_lea.vmem [#allocation3], %s207
        %p209 = pneg %p55
        %p210 = pneg %p52
        %p211 = scmp.lt.s32.totalorder %s24, 1
        %s212 = scalar_select %p211, %s24, 1
        %p213 = scmp.lt.s32.totalorder %s25, 0
        %s214 = scalar_select %p213, %s25, 0
        %s215 = sadd.s32 %s214, %s212
        %s216 = scalar_lea.vmem %s1, %s215
        %p217 = pneg %p83
        %p218 = pneg %p80
        %p219 = scmp.lt.s32.totalorder %s24, 1
        %s220 = scalar_select %p219, %s24, 1
        %s221 = scalar_lea.vmem %s2, %s220
        %p222 = pneg %p109
        %p223 = pneg %p106
        %p224 = pneg %p135
        %p225 = pneg %p132
        %s226 = sand.u32 %s122, 1
        %s227 = scalar_lea.sflag [#allocation5], %s226
        %s228 = sand.u32 %s122, 1
        %s229 = scalar_lea.vmem [#allocation6], %s228
        %p230 = scmp.lt.s32.totalorder %s24, 1
        %s231 = scalar_select %p230, %s24, 1
        %p232 = scmp.lt.s32.totalorder %s25, 0
        %s233 = scalar_select %p232, %s25, 0
        %s234 = sadd.s32 %s233, %s231
        %s235 = scalar_lea.vmem %s1, %s234
        %p236 = scmp.lt.s32.totalorder %s24, 1
        %s237 = scalar_select %p236, %s24, 1
        %s238 = scalar_lea.vmem %s2, %s237
        %p239 = scmp.eq.s32.totalorder %s25, 0
        // Predicated region
        $region37: #{tpu_custom_call.1} parent=31 // pred_check
          %p240 = pneg %p239
        $region38: #{tpu_custom_call.1} parent=31 // pred_check_branch
          %242 = sbr.rel (%p240) target = $region40
        $region39: #{tpu_custom_call.1} parent=31 // pred_region
          %vm243 = vcmask 253952
          %244 = vst.msk [vmem:[#allocation2] sm:$0x1] %vm243, 0.0
        $region40: #{tpu_custom_call.1} parent=31 // pred_fallthru
          _
        %v245 = vld [vmem:[#allocation2] sm:$0x1]
        %v246 = vld [vmem:[%s235] sm:$0x1]
        %v247 = vld [vmem:[%s199] sm:$0xff]
        %vm248 = vcmask 64512
        %v250 = vsel %vm248, %v246, 0
        %252 = vmatprep.subr.mxu0 0.0
        %253 = vmatpush1.msra.mxu0 0.0
        %254 = vmatprep.subr.mxu0 0.0
        %255 = vmatpush1.msra.mxu0 0.0
        %256 = vmatprep.subr.mxu0 0.0
        %257 = vmatpush1.msra.mxu0 0.0
        %258 = vmatprep.subr.mxu0 0.0
        %259 = vmatpush1.msra.mxu0 0.0
        %260 = vmatprep.subr.mxu0 0.0
        %261 = vmatpush1.msra.mxu0 0.0
        %262 = vmatprep.subr.mxu0 0.0
        %263 = vmatpush1.msra.mxu0 0.0
        %264 = vmatprep.subr.mxu0 0.0
        %265 = vmatpush1.msra.mxu0 0.0
        %266 = vmatprep.subr.mxu0 0.0
        %267 = vmatpush1.msra.mxu0 0.0
        %268 = vmatprep.subr.mxu0 0.0
        %269 = vmatpush1.msra.mxu0 0.0
        %270 = vmatprep.subr.mxu0 0.0
        %271 = vmatpush1.msra.mxu0 0.0
        %272 = vmatprep.subr.mxu0 0.0
        %273 = vmatpush1.msra.mxu0 0.0
        %274 = vmatprep.subr.mxu0 0.0
        %275 = vmatpush1.msra.mxu0 0.0
        %276 = vmatprep.subr.mxu0 0.0
        %277 = vmatpush1.msra.mxu0 0.0
        %278 = vmatprep.subr.mxu0 0.0
        %279 = vmatpush1.msra.mxu0 0.0
        %280 = vmatprep.subr.mxu0 0.0
        %281 = vmatpush1.msra.mxu0 0.0
        %282 = vmatprep.subr.mxu0 0.0
        %v283 = vand.u32 %v247, 4294901760
        %284 = vmatpush1.msra.mxu0 %v283
        %285 = vmatprep.subr.mxu0 0.0
        %286 = vmatpush2.msra.mxu0 0.0
        %287 = vmatprep.subr.mxu0 0.0
        %288 = vmatpush2.msra.mxu0 0.0
        %289 = vmatprep.subr.mxu0 0.0
        %290 = vmatpush2.msra.mxu0 0.0
        %291 = vmatprep.subr.mxu0 0.0
        %292 = vmatpush2.msra.mxu0 0.0
        %293 = vmatprep.subr.mxu0 0.0
        %294 = vmatpush2.msra.mxu0 0.0
        %295 = vmatprep.subr.mxu0 0.0
        %296 = vmatpush2.msra.mxu0 0.0
        %297 = vmatprep.subr.mxu0 0.0
        %298 = vmatpush2.msra.mxu0 0.0
        %299 = vmatprep.subr.mxu0 0.0
        %300 = vmatpush2.msra.mxu0 0.0
        %301 = vmatprep.subr.mxu0 0.0
        %302 = vmatpush2.msra.mxu0 0.0
        %303 = vmatprep.subr.mxu0 0.0
        %304 = vmatpush2.msra.mxu0 0.0
        %305 = vmatprep.subr.mxu0 0.0
        %306 = vmatpush2.msra.mxu0 0.0
        %307 = vmatprep.subr.mxu0 0.0
        %308 = vmatpush2.msra.mxu0 0.0
        %309 = vmatprep.subr.mxu0 0.0
        %310 = vmatpush2.msra.mxu0 0.0
        %311 = vmatprep.subr.mxu0 0.0
        %312 = vmatpush2.msra.mxu0 0.0
        %313 = vmatprep.subr.mxu0 0.0
        %314 = vmatpush2.msra.mxu0 0.0
        %315 = vmatprep.subr.mxu0 0.0
        %316 = vmatpush2.msra.mxu0 0.0
        %317 = vmatprep.mubr.f32.mxu0 0.0
        %v318 = vand.u32 %v250, 4294901760
        %v319 = vsub.f32 %v250, %v318
        %v320 = vand.u32 %v319, 4294901760
        %v321 = vsub.f32 %v319, %v320
        %v322 = vand.u32 %v321, 4294901760
        %323 = vmatmul.mubr.f32.gmra.mxu0 %v322
        %v324 = vpop.f32.mrf.mxu0
        %v325 = vadd.f32 0.0, %v324
        %v326 = vpop.f32.mrf.mxu0
        %327 = vdwg.mxu0
        %328 = vmatprep.subr.mxu0 0.0
        %329 = vmatpush1.msra.mxu0 0.0
        %330 = vmatprep.subr.mxu0 0.0
        %331 = vmatpush1.msra.mxu0 0.0
        %332 = vmatprep.subr.mxu0 0.0
        %333 = vmatpush1.msra.mxu0 0.0
        %334 = vmatprep.subr.mxu0 0.0
        %335 = vmatpush1.msra.mxu0 0.0
        %336 = vmatprep.subr.mxu0 0.0
        %337 = vmatpush1.msra.mxu0 0.0
        %338 = vmatprep.subr.mxu0 0.0
        %339 = vmatpush1.msra.mxu0 0.0
        %340 = vmatprep.subr.mxu0 0.0
        %341 = vmatpush1.msra.mxu0 0.0
        %342 = vmatprep.subr.mxu0 0.0
        %343 = vmatpush1.msra.mxu0 0.0
        %344 = vmatprep.subr.mxu0 0.0
        %345 = vmatpush1.msra.mxu0 0.0
        %346 = vmatprep.subr.mxu0 0.0
        %347 = vmatpush1.msra.mxu0 0.0
        %348 = vmatprep.subr.mxu0 0.0
        %349 = vmatpush1.msra.mxu0 0.0
        %350 = vmatprep.subr.mxu0 0.0
        %351 = vmatpush1.msra.mxu0 0.0
        %352 = vmatprep.subr.mxu0 0.0
        %353 = vmatpush1.msra.mxu0 0.0
        %354 = vmatprep.subr.mxu0 0.0
        %355 = vmatpush1.msra.mxu0 0.0
        %356 = vmatprep.subr.mxu0 0.0
        %357 = vmatpush1.msra.mxu0 0.0
        %358 = vmatprep.subr.mxu0 0.0
        %v359 = vand.u32 %v247, 4294901760
        %v360 = vsub.f32 %v247, %v359
        %v361 = vand.u32 %v360, 4294901760
        %v362 = vsub.f32 %v360, %v361
        %v363 = vand.u32 %v362, 4294901760
        %364 = vmatpush1.msra.mxu0 %v363
        %365 = vmatprep.subr.mxu0 0.0
        %366 = vmatpush2.msra.mxu0 0.0
        %367 = vmatprep.subr.mxu0 0.0
        %368 = vmatpush2.msra.mxu0 0.0
        %369 = vmatprep.subr.mxu0 0.0
        %370 = vmatpush2.msra.mxu0 0.0
        %371 = vmatprep.subr.mxu0 0.0
        %372 = vmatpush2.msra.mxu0 0.0
        %373 = vmatprep.subr.mxu0 0.0
        %374 = vmatpush2.msra.mxu0 0.0
        %375 = vmatprep.subr.mxu0 0.0
        %376 = vmatpush2.msra.mxu0 0.0
        %377 = vmatprep.subr.mxu0 0.0
        %378 = vmatpush2.msra.mxu0 0.0
        %379 = vmatprep.subr.mxu0 0.0
        %380 = vmatpush2.msra.mxu0 0.0
        %381 = vmatprep.subr.mxu0 0.0
        %382 = vmatpush2.msra.mxu0 0.0
        %383 = vmatprep.subr.mxu0 0.0
        %384 = vmatpush2.msra.mxu0 0.0
        %385 = vmatprep.subr.mxu0 0.0
        %386 = vmatpush2.msra.mxu0 0.0
        %387 = vmatprep.subr.mxu0 0.0
        %388 = vmatpush2.msra.mxu0 0.0
        %389 = vmatprep.subr.mxu0 0.0
        %390 = vmatpush2.msra.mxu0 0.0
        %391 = vmatprep.subr.mxu0 0.0
        %392 = vmatpush2.msra.mxu0 0.0
        %393 = vmatprep.subr.mxu0 0.0
        %394 = vmatpush2.msra.mxu0 0.0
        %395 = vmatprep.subr.mxu0 0.0
        %396 = vmatpush2.msra.mxu0 0.0
        %397 = vmatprep.mubr.f32.mxu0 0.0
        %v398 = vand.u32 %v250, 4294901760
        %399 = vmatmul.mubr.f32.gmra.mxu0 %v398
        %v400 = vpop.f32.mrf.mxu0
        %v401 = vadd.f32 %v325, %v400
        %v402 = vpop.f32.mrf.mxu0
        %403 = vdwg.mxu0
        %404 = vmatprep.subr.mxu0 0.0
        %405 = vmatpush1.msra.mxu0 0.0
        %406 = vmatprep.subr.mxu0 0.0
        %407 = vmatpush1.msra.mxu0 0.0
        %408 = vmatprep.subr.mxu0 0.0
        %409 = vmatpush1.msra.mxu0 0.0
        %410 = vmatprep.subr.mxu0 0.0
        %411 = vmatpush1.msra.mxu0 0.0
        %412 = vmatprep.subr.mxu0 0.0
        %413 = vmatpush1.msra.mxu0 0.0
        %414 = vmatprep.subr.mxu0 0.0
        %415 = vmatpush1.msra.mxu0 0.0
        %416 = vmatprep.subr.mxu0 0.0
        %417 = vmatpush1.msra.mxu0 0.0
        %418 = vmatprep.subr.mxu0 0.0
        %419 = vmatpush1.msra.mxu0 0.0
        %420 = vmatprep.subr.mxu0 0.0
        %421 = vmatpush1.msra.mxu0 0.0
        %422 = vmatprep.subr.mxu0 0.0
        %423 = vmatpush1.msra.mxu0 0.0
        %424 = vmatprep.subr.mxu0 0.0
        %425 = vmatpush1.msra.mxu0 0.0
        %426 = vmatprep.subr.mxu0 0.0
        %427 = vmatpush1.msra.mxu0 0.0
        %428 = vmatprep.subr.mxu0 0.0
        %429 = vmatpush1.msra.mxu0 0.0
        %430 = vmatprep.subr.mxu0 0.0
        %431 = vmatpush1.msra.mxu0 0.0
        %432 = vmatprep.subr.mxu0 0.0
        %433 = vmatpush1.msra.mxu0 0.0
        %434 = vmatprep.subr.mxu0 0.0
        %v435 = vand.u32 %v247, 4294901760
        %v436 = vsub.f32 %v247, %v435
        %437 = vmatpush1.msra.mxu0 %v436
        %438 = vmatprep.subr.mxu0 0.0
        %439 = vmatpush2.msra.mxu0 0.0
        %440 = vmatprep.subr.mxu0 0.0
        %441 = vmatpush2.msra.mxu0 0.0
        %442 = vmatprep.subr.mxu0 0.0
        %443 = vmatpush2.msra.mxu0 0.0
        %444 = vmatprep.subr.mxu0 0.0
        %445 = vmatpush2.msra.mxu0 0.0
        %446 = vmatprep.subr.mxu0 0.0
        %447 = vmatpush2.msra.mxu0 0.0
        %448 = vmatprep.subr.mxu0 0.0
        %449 = vmatpush2.msra.mxu0 0.0
        %450 = vmatprep.subr.mxu0 0.0
        %451 = vmatpush2.msra.mxu0 0.0
        %452 = vmatprep.subr.mxu0 0.0
        %453 = vmatpush2.msra.mxu0 0.0
        %454 = vmatprep.subr.mxu0 0.0
        %455 = vmatpush2.msra.mxu0 0.0
        %456 = vmatprep.subr.mxu0 0.0
        %457 = vmatpush2.msra.mxu0 0.0
        %458 = vmatprep.subr.mxu0 0.0
        %459 = vmatpush2.msra.mxu0 0.0
        %460 = vmatprep.subr.mxu0 0.0
        %461 = vmatpush2.msra.mxu0 0.0
        %462 = vmatprep.subr.mxu0 0.0
        %463 = vmatpush2.msra.mxu0 0.0
        %464 = vmatprep.subr.mxu0 0.0
        %465 = vmatpush2.msra.mxu0 0.0
        %466 = vmatprep.subr.mxu0 0.0
        %467 = vmatpush2.msra.mxu0 0.0
        %468 = vmatprep.subr.mxu0 0.0
        %469 = vmatpush2.msra.mxu0 0.0
        %470 = vmatprep.mubr.f32.mxu0 0.0
        %v471 = vand.u32 %v250, 4294901760
        %v472 = vsub.f32 %v250, %v471
        %473 = vmatmul.mubr.f32.gmra.mxu0 %v472
        %v474 = vpop.f32.mrf.mxu0
        %v475 = vadd.f32 %v401, %v474
        %v476 = vpop.f32.mrf.mxu0
        %477 = vdwg.mxu0
        %478 = vmatprep.subr.mxu0 0.0
        %479 = vmatpush1.msra.mxu0 0.0
        %480 = vmatprep.subr.mxu0 0.0
        %481 = vmatpush1.msra.mxu0 0.0
        %482 = vmatprep.subr.mxu0 0.0
        %483 = vmatpush1.msra.mxu0 0.0
        %484 = vmatprep.subr.mxu0 0.0
        %485 = vmatpush1.msra.mxu0 0.0
        %486 = vmatprep.subr.mxu0 0.0
        %487 = vmatpush1.msra.mxu0 0.0
        %488 = vmatprep.subr.mxu0 0.0
        %489 = vmatpush1.msra.mxu0 0.0
        %490 = vmatprep.subr.mxu0 0.0
        %491 = vmatpush1.msra.mxu0 0.0
        %492 = vmatprep.subr.mxu0 0.0
        %493 = vmatpush1.msra.mxu0 0.0
        %494 = vmatprep.subr.mxu0 0.0
        %495 = vmatpush1.msra.mxu0 0.0
        %496 = vmatprep.subr.mxu0 0.0
        %497 = vmatpush1.msra.mxu0 0.0
        %498 = vmatprep.subr.mxu0 0.0
        %499 = vmatpush1.msra.mxu0 0.0
        %500 = vmatprep.subr.mxu0 0.0
        %501 = vmatpush1.msra.mxu0 0.0
        %502 = vmatprep.subr.mxu0 0.0
        %503 = vmatpush1.msra.mxu0 0.0
        %504 = vmatprep.subr.mxu0 0.0
        %505 = vmatpush1.msra.mxu0 0.0
        %506 = vmatprep.subr.mxu0 0.0
        %507 = vmatpush1.msra.mxu0 0.0
        %508 = vmatprep.subr.mxu0 0.0
        %v509 = vand.u32 %v247, 4294901760
        %510 = vmatpush1.msra.mxu0 %v509
        %511 = vmatprep.subr.mxu0 0.0
        %512 = vmatpush2.msra.mxu0 0.0
        %513 = vmatprep.subr.mxu0 0.0
        %514 = vmatpush2.msra.mxu0 0.0
        %515 = vmatprep.subr.mxu0 0.0
        %516 = vmatpush2.msra.mxu0 0.0
        %517 = vmatprep.subr.mxu0 0.0
        %518 = vmatpush2.msra.mxu0 0.0
        %519 = vmatprep.subr.mxu0 0.0
        %520 = vmatpush2.msra.mxu0 0.0
        %521 = vmatprep.subr.mxu0 0.0
        %522 = vmatpush2.msra.mxu0 0.0
        %523 = vmatprep.subr.mxu0 0.0
        %524 = vmatpush2.msra.mxu0 0.0
        %525 = vmatprep.subr.mxu0 0.0
        %526 = vmatpush2.msra.mxu0 0.0
        %527 = vmatprep.subr.mxu0 0.0
        %528 = vmatpush2.msra.mxu0 0.0
        %529 = vmatprep.subr.mxu0 0.0
        %530 = vmatpush2.msra.mxu0 0.0
        %531 = vmatprep.subr.mxu0 0.0
        %532 = vmatpush2.msra.mxu0 0.0
        %533 = vmatprep.subr.mxu0 0.0
        %534 = vmatpush2.msra.mxu0 0.0
        %535 = vmatprep.subr.mxu0 0.0
        %536 = vmatpush2.msra.mxu0 0.0
        %537 = vmatprep.subr.mxu0 0.0
        %538 = vmatpush2.msra.mxu0 0.0
        %539 = vmatprep.subr.mxu0 0.0
        %540 = vmatpush2.msra.mxu0 0.0
        %541 = vmatprep.subr.mxu0 0.0
        %542 = vmatpush2.msra.mxu0 0.0
        %543 = vmatprep.mubr.f32.mxu0 0.0
        %v544 = vand.u32 %v250, 4294901760
        %v545 = vsub.f32 %v250, %v544
        %v546 = vand.u32 %v545, 4294901760
        %547 = vmatmul.mubr.f32.gmra.mxu0 %v546
        %v548 = vpop.f32.mrf.mxu0
        %v549 = vadd.f32 %v475, %v548
        %v550 = vpop.f32.mrf.mxu0
        %551 = vdwg.mxu0
        %552 = vmatprep.subr.mxu0 0.0
        %553 = vmatpush1.msra.mxu0 0.0
        %554 = vmatprep.subr.mxu0 0.0
        %555 = vmatpush1.msra.mxu0 0.0
        %556 = vmatprep.subr.mxu0 0.0
        %557 = vmatpush1.msra.mxu0 0.0
        %558 = vmatprep.subr.mxu0 0.0
        %559 = vmatpush1.msra.mxu0 0.0
        %560 = vmatprep.subr.mxu0 0.0
        %561 = vmatpush1.msra.mxu0 0.0
        %562 = vmatprep.subr.mxu0 0.0
        %563 = vmatpush1.msra.mxu0 0.0
        %564 = vmatprep.subr.mxu0 0.0
        %565 = vmatpush1.msra.mxu0 0.0
        %566 = vmatprep.subr.mxu0 0.0
        %567 = vmatpush1.msra.mxu0 0.0
        %568 = vmatprep.subr.mxu0 0.0
        %569 = vmatpush1.msra.mxu0 0.0
        %570 = vmatprep.subr.mxu0 0.0
        %571 = vmatpush1.msra.mxu0 0.0
        %572 = vmatprep.subr.mxu0 0.0
        %573 = vmatpush1.msra.mxu0 0.0
        %574 = vmatprep.subr.mxu0 0.0
        %575 = vmatpush1.msra.mxu0 0.0
        %576 = vmatprep.subr.mxu0 0.0
        %577 = vmatpush1.msra.mxu0 0.0
        %578 = vmatprep.subr.mxu0 0.0
        %579 = vmatpush1.msra.mxu0 0.0
        %580 = vmatprep.subr.mxu0 0.0
        %581 = vmatpush1.msra.mxu0 0.0
        %582 = vmatprep.subr.mxu0 0.0
        %v583 = vand.u32 %v247, 4294901760
        %v584 = vsub.f32 %v247, %v583
        %v585 = vand.u32 %v584, 4294901760
        %586 = vmatpush1.msra.mxu0 %v585
        %587 = vmatprep.subr.mxu0 0.0
        %588 = vmatpush2.msra.mxu0 0.0
        %589 = vmatprep.subr.mxu0 0.0
        %590 = vmatpush2.msra.mxu0 0.0
        %591 = vmatprep.subr.mxu0 0.0
        %592 = vmatpush2.msra.mxu0 0.0
        %593 = vmatprep.subr.mxu0 0.0
        %594 = vmatpush2.msra.mxu0 0.0
        %595 = vmatprep.subr.mxu0 0.0
        %596 = vmatpush2.msra.mxu0 0.0
        %597 = vmatprep.subr.mxu0 0.0
        %598 = vmatpush2.msra.mxu0 0.0
        %599 = vmatprep.subr.mxu0 0.0
        %600 = vmatpush2.msra.mxu0 0.0
        %601 = vmatprep.subr.mxu0 0.0
        %602 = vmatpush2.msra.mxu0 0.0
        %603 = vmatprep.subr.mxu0 0.0
        %604 = vmatpush2.msra.mxu0 0.0
        %605 = vmatprep.subr.mxu0 0.0
        %606 = vmatpush2.msra.mxu0 0.0
        %607 = vmatprep.subr.mxu0 0.0
        %608 = vmatpush2.msra.mxu0 0.0
        %609 = vmatprep.subr.mxu0 0.0
        %610 = vmatpush2.msra.mxu0 0.0
        %611 = vmatprep.subr.mxu0 0.0
        %612 = vmatpush2.msra.mxu0 0.0
        %613 = vmatprep.subr.mxu0 0.0
        %614 = vmatpush2.msra.mxu0 0.0
        %615 = vmatprep.subr.mxu0 0.0
        %616 = vmatpush2.msra.mxu0 0.0
        %617 = vmatprep.subr.mxu0 0.0
        %618 = vmatpush2.msra.mxu0 0.0
        %619 = vmatprep.mubr.f32.mxu0 0.0
        %v620 = vand.u32 %v250, 4294901760
        %621 = vmatmul.mubr.f32.gmra.mxu0 %v620
        %v622 = vpop.f32.mrf.mxu0
        %v623 = vadd.f32 %v549, %v622
        %v624 = vpop.f32.mrf.mxu0
        %625 = vdwg.mxu0
        %626 = vmatprep.subr.mxu0 0.0
        %627 = vmatpush1.msra.mxu0 0.0
        %628 = vmatprep.subr.mxu0 0.0
        %629 = vmatpush1.msra.mxu0 0.0
        %630 = vmatprep.subr.mxu0 0.0
        %631 = vmatpush1.msra.mxu0 0.0
        %632 = vmatprep.subr.mxu0 0.0
        %633 = vmatpush1.msra.mxu0 0.0
        %634 = vmatprep.subr.mxu0 0.0
        %635 = vmatpush1.msra.mxu0 0.0
        %636 = vmatprep.subr.mxu0 0.0
        %637 = vmatpush1.msra.mxu0 0.0
        %638 = vmatprep.subr.mxu0 0.0
        %639 = vmatpush1.msra.mxu0 0.0
        %640 = vmatprep.subr.mxu0 0.0
        %641 = vmatpush1.msra.mxu0 0.0
        %642 = vmatprep.subr.mxu0 0.0
        %643 = vmatpush1.msra.mxu0 0.0
        %644 = vmatprep.subr.mxu0 0.0
        %645 = vmatpush1.msra.mxu0 0.0
        %646 = vmatprep.subr.mxu0 0.0
        %647 = vmatpush1.msra.mxu0 0.0
        %648 = vmatprep.subr.mxu0 0.0
        %649 = vmatpush1.msra.mxu0 0.0
        %650 = vmatprep.subr.mxu0 0.0
        %651 = vmatpush1.msra.mxu0 0.0
        %652 = vmatprep.subr.mxu0 0.0
        %653 = vmatpush1.msra.mxu0 0.0
        %654 = vmatprep.subr.mxu0 0.0
        %655 = vmatpush1.msra.mxu0 0.0
        %656 = vmatprep.subr.mxu0 0.0
        %v657 = vand.u32 %v247, 4294901760
        %658 = vmatpush1.msra.mxu0 %v657
        %659 = vmatprep.subr.mxu0 0.0
        %660 = vmatpush2.msra.mxu0 0.0
        %661 = vmatprep.subr.mxu0 0.0
        %662 = vmatpush2.msra.mxu0 0.0
        %663 = vmatprep.subr.mxu0 0.0
        %664 = vmatpush2.msra.mxu0 0.0
        %665 = vmatprep.subr.mxu0 0.0
        %666 = vmatpush2.msra.mxu0 0.0
        %667 = vmatprep.subr.mxu0 0.0
        %668 = vmatpush2.msra.mxu0 0.0
        %669 = vmatprep.subr.mxu0 0.0
        %670 = vmatpush2.msra.mxu0 0.0
        %671 = vmatprep.subr.mxu0 0.0
        %672 = vmatpush2.msra.mxu0 0.0
        %673 = vmatprep.subr.mxu0 0.0
        %674 = vmatpush2.msra.mxu0 0.0
        %675 = vmatprep.subr.mxu0 0.0
        %676 = vmatpush2.msra.mxu0 0.0
        %677 = vmatprep.subr.mxu0 0.0
        %678 = vmatpush2.msra.mxu0 0.0
        %679 = vmatprep.subr.mxu0 0.0
        %680 = vmatpush2.msra.mxu0 0.0
        %681 = vmatprep.subr.mxu0 0.0
        %682 = vmatpush2.msra.mxu0 0.0
        %683 = vmatprep.subr.mxu0 0.0
        %684 = vmatpush2.msra.mxu0 0.0
        %685 = vmatprep.subr.mxu0 0.0
        %686 = vmatpush2.msra.mxu0 0.0
        %687 = vmatprep.subr.mxu0 0.0
        %688 = vmatpush2.msra.mxu0 0.0
        %689 = vmatprep.subr.mxu0 0.0
        %690 = vmatpush2.msra.mxu0 0.0
        %691 = vmatprep.mubr.f32.mxu0 0.0
        %v692 = vand.u32 %v250, 4294901760
        %693 = vmatmul.mubr.f32.gmra.mxu0 %v692
        %v694 = vpop.f32.mrf.mxu0
        %v695 = vadd.f32 %v623, %v694
        %v696 = vpop.f32.mrf.mxu0
        %697 = vdwg.mxu0
        %v698 = vadd.f32 %v245, %v695
        %vm699 = vcmask 253952
        %700 = vst.msk [vmem:[#allocation2] sm:$0x1] %vm699, %v698
        // Predicated region
        $region41: #{tpu_custom_call.1} parent=31 // pred_check
          %p701 = pneg %p239
        $region42: #{tpu_custom_call.1} parent=31 // pred_check_branch
          %703 = sbr.rel (%p701) target = $region44
        $region43: #{tpu_custom_call.1} parent=31 // pred_region
          %v704 = vld [vmem:[%s238] sm:$0x1]
          %v705 = vmax.f32 %v704, 1.0
          %v706 = vrcp.pop %v705
          %v707 = vld [vmem:[#allocation2] sm:$0x1]
          %709 = vset.pattern.permute.xlu0 0
          %710 = vperm.xlu0 %709, %v706
          %v711 = vpop.permute.xlu0 %710
          %v713 = vlaneseq
          %v714 = vshrl.u32 %v713, 7
          %v715 = vsub.s32 0, %v714
          %v716 = vrot.slane %v711, %v715
          %v717 = vmul.f32 %v707, %v716
          %718 = vst.msk [vmem:[%s229] sm:$0x1] %vm699, %v717
        $region44: #{tpu_custom_call.1} parent=31 // pred_fallthru
          _
        %s719 = sand.u32 %s122, 1
        %s720 = scalar_lea.sflag [#allocation5], %s719
        %s721 = sand.u32 %s122, 1
        %s722 = scalar_lea.vmem [#allocation6], %s721
        // Predicated region
        $region45: #{tpu_custom_call.1} parent=31 // pred_check
          %p723 = pneg %p132
        $region46: #{tpu_custom_call.1} parent=31 // pred_check_branch
          %725 = sbr.rel (%p723) target = $region48
        $region47: #{tpu_custom_call.1} parent=31 // pred_region
          %s727 = ssub.s32 16, 16
          %728 = vsyncadd %s720, %s727
          %s729 = smul.addr %s24, 16
          %s730 = scalar_lea.hbm %s3, %s729
          %s732 = sshll.u32 %s722, 4
          %s733 = int_to_ptr.vmem [resolvable:$true] %s732
          %735 = dma.vmem_to_hbm [thread:$0]  %s733, 16, %s730, %s720
        $region48: #{tpu_custom_call.1} parent=31 // pred_fallthru
          _
      $region32: #{tpu_custom_call.1} parent=5 // pred_fallthru
        _
      %p736 = scmp.le.s32.totalorder 2, %s15
      // Predicated region
      $region49: #{tpu_custom_call.1} parent=5 // pred_check
        %p737 = pneg %p736
      $region50: #{tpu_custom_call.1} parent=5 // pred_check_branch
        %739 = sbr.rel (%p737) target = $region52
      $region51: #{tpu_custom_call.1} parent=5 // pred_region
        %s740 = ssub.s32 %s15, 2
        // Predicated region
        $region53: #{tpu_custom_call.1} parent=51 // pred_check
          %p741 = pneg %p138
        $region54: #{tpu_custom_call.1} parent=51 // pred_check_branch
          %743 = sbr.rel (%p741) target = $region56
        $region55: #{tpu_custom_call.1} parent=51 // pred_region
          %s744 = sand.u32 %s123, 1
          %s745 = scalar_lea.sflag [#allocation5], %s744
          %s746 = sand.u32 %s123, 1
          %s747 = scalar_lea.vmem [#allocation6], %s746
          %748 = dma.done %s745, 16
        $region56: #{tpu_custom_call.1} parent=51 // pred_fallthru
          _
      $region52: #{tpu_custom_call.1} parent=5 // pred_fallthru
        _
    $region6: #{tpu_custom_call.1} parent=1 // loop_footer
      %s19 = sadd.s32 1, %s15
    $region7: #{tpu_custom_call.1} parent=1 // loop_footer_branch
      %14 = sbr.rel target = $region3
    $region8: #{tpu_custom_call.1} parent=1 // loop_exit
      _
    %749 = vsyncpa [#allocation4], 1
    %s750 = scalar_lea.sflag [#allocation4], 1
    %751 = vsyncpa %s750, 1
    %752 = vsyncpa [#allocation5], 1
    %s753 = scalar_lea.sflag [#allocation5], 1
    %754 = vsyncpa %s753, 1

</llo_original>
